<compile_context>
chip_gen: v7x
topology: tpu7x:2x2x1
jax: 0.10.0
libtpu: 0.0.40
codegen_flags: <defaults>
</compile_context>

<pallas_src>
import jax
import jax.numpy as jnp
from jax.experimental import pallas as pl
from jax.experimental.pallas import tpu as pltpu


def _round_up(n, m):
    return ((n + m - 1) // m) * m


def mlp_kernel(x_ref, w1_ref, b1_ref, w2_ref, b2_ref,
               w3_ref, b3_ref, w4_ref, b4_ref, o_ref):
    """relu(relu(relu(relu(x@W1+b1)@W2+b2)@W3+b3)@W4+b4) on one batch tile."""
    def dense_relu(h, w_ref, b_ref):
        # Matmul operands in the weight dtype (f32 or bf16), f32 accumulation.
        y = jnp.dot(h.astype(w_ref.dtype), w_ref[...],
                    preferred_element_type=jnp.float32)
        # Bias add + ReLU stay in f32 (v5e VPU has no bf16).
        return jnp.maximum(y + b_ref[...], 0.0)

    h = x_ref[...]
    h = dense_relu(h, w1_ref, b1_ref)
    h = dense_relu(h, w2_ref, b2_ref)
    h = dense_relu(h, w3_ref, b3_ref)
    h = dense_relu(h, w4_ref, b4_ref)
    o_ref[...] = h.astype(o_ref.dtype)


def init_params(key, input_size, h1, h2, h3, num_classes):
    """PyTorch-style nn.Linear params: weight (out, in), bias (out,), f32."""
    ks = jax.random.split(key, 8)

    def linear(kw, kb, fan_in, fan_out):
        bound = 1.0 / jnp.sqrt(fan_in)
        w = jax.random.uniform(kw, (fan_out, fan_in), jnp.float32, -bound, bound)
        b = jax.random.uniform(kb, (fan_out,), jnp.float32, -bound, bound)
        return w, b

    w1, b1 = linear(ks[0], ks[1], input_size, h1)
    w2, b2 = linear(ks[2], ks[3], h1, h2)
    w3, b3 = linear(ks[4], ks[5], h2, h3)
    w4, b4 = linear(ks[6], ks[7], h3, num_classes)
    return dict(w1=w1, b1=b1, w2=w2, b2=b2, w3=w3, b3=b3, w4=w4, b4=b4)


def prepare_params(params, compute_dtype=jnp.float32, lane_pad=128):
    """One-time conversion to kernel layout: W -> (in, out) in compute_dtype,
    b -> (1, out) f32, last layer zero-padded to a lane-dense width."""
    def prep_w(w):
        return jnp.asarray(w.T, dtype=compute_dtype)

    def prep_b(b):
        return jnp.asarray(b, dtype=jnp.float32).reshape(1, -1)

    w4, b4 = params["w4"], params["b4"]
    num_classes = w4.shape[0]
    out_pad = _round_up(max(num_classes, lane_pad), lane_pad)
    w4p = jnp.zeros((w4.shape[1], out_pad), compute_dtype)
    w4p = w4p.at[:, :num_classes].set(w4.T.astype(compute_dtype))
    b4p = jnp.zeros((1, out_pad), jnp.float32).at[:, :num_classes].set(b4)

    return dict(
        w1=prep_w(params["w1"]), b1=prep_b(params["b1"]),
        w2=prep_w(params["w2"]), b2=prep_b(params["b2"]),
        w3=prep_w(params["w3"]), b3=prep_b(params["b3"]),
        w4=w4p, b4=b4p, num_classes=num_classes,
    )


def mlp_forward(x, prep, *, block_b=128):
    """x: (B, 1, 28, 28) f32 NCHW. prep: output of prepare_params()."""
    compute_dtype = prep["w1"].dtype
    in_dim = prep["w1"].shape[0]
    out_pad = prep["w4"].shape[1]
    num_classes = prep["num_classes"]

    B = x.shape[0]
    x2d = x.reshape(B, -1).astype(compute_dtype)          # x.view(-1, 784)

    # Sublane-aligned batch tile: 8 for f32, 16 for bf16.
    sub = 8 if compute_dtype == jnp.float32 else 16
    tb = min(block_b, _round_up(B, sub))
    bp = _round_up(B, tb)
    if bp != B:
        x2d = jnp.pad(x2d, ((0, bp - B), (0, 0)))

    weights = (prep["w1"], prep["b1"], prep["w2"], prep["b2"],
               prep["w3"], prep["b3"], prep["w4"], prep["b4"])

    def full_spec(a):
        # Weights/biases: whole array, same block for every grid step
        # -> fetched once, resident in VMEM across the batch loop.
        return pl.BlockSpec(a.shape, lambda b: (0,) * a.ndim)

    in_specs = ([pl.BlockSpec((tb, in_dim), lambda b: (b, 0))]
                + [full_spec(a) for a in weights])
    out_specs = pl.BlockSpec((tb, out_pad), lambda b: (b, 0))

    d1, d2, d3 = prep["w1"].shape[1], prep["w2"].shape[1], prep["w3"].shape[1]
    flops = 2 * bp * (in_dim * d1 + d1 * d2 + d2 * d3 + d3 * out_pad)
    bytes_accessed = (x2d.size * x2d.dtype.itemsize
                      + sum(a.size * a.dtype.itemsize for a in weights)
                      + bp * out_pad * 4)

    out = pl.pallas_call(
        mlp_kernel,
        out_shape=jax.ShapeDtypeStruct((bp, out_pad), jnp.float32),
        grid=(bp // tb,),
        in_specs=in_specs,
        out_specs=out_specs,
        compiler_params=pltpu.CompilerParams(
            dimension_semantics=("parallel",),
            vmem_limit_bytes=8 << 20,
        ),
        cost_estimate=pl.CostEstimate(
            flops=flops, transcendentals=0, bytes_accessed=bytes_accessed),
    )(x2d, *weights)

    return out[:B, :num_classes]


def reference_forward(x, p):
    """Pure-JAX reference matching the PyTorch module exactly (ReLU after fc4)."""
    h = x.reshape(-1, 28 * 28)
    h = jnp.maximum(h @ p["w1"].T + p["b1"], 0.0)
    h = jnp.maximum(h @ p["w2"].T + p["b2"], 0.0)
    h = jnp.maximum(h @ p["w3"].T + p["b3"], 0.0)
    h = jnp.maximum(h @ p["w4"].T + p["b4"], 0.0)
    return h


if __name__ == "__main__":
    key = jax.random.PRNGKey(0)
    k_x, k_p = jax.random.split(key)

    input_size, h1, h2, h3, num_classes = 28 * 28, 128, 64, 32, 10
    batch = 2

    x = jax.random.normal(k_x, (batch, 1, 28, 28), jnp.float32)  # NCHW
    params = init_params(k_p, input_size, h1, h2, h3, num_classes)
    ref = reference_forward(x, params)

    # f32 matmul path (bit-faithful to the PyTorch module).
    prep_f32 = prepare_params(params, compute_dtype=jnp.float32)
    out_f32 = jax.block_until_ready(mlp_forward(x, prep_f32))
    assert out_f32.shape == (batch, num_classes)
    assert jnp.allclose(out_f32, ref, atol=1e-4, rtol=1e-4), "f32 mismatch vs reference"

    # bf16 matmul path (f32 accumulation) — the v6e/v7x MXU-native option.
    prep_bf16 = prepare_params(params, compute_dtype=jnp.bfloat16)
    out_bf16 = jax.block_until_ready(mlp_forward(x, prep_bf16))
    assert out_bf16.shape == (batch, num_classes)
    assert jnp.allclose(out_bf16, ref, atol=1e-1, rtol=1e-1), "bf16 mismatch vs reference"

    print("KERNEL_OK")
</pallas_src>

<mosaic_0001>
module attributes {stable_mosaic.version = 11 : i64} {
  func.func @mlp_kernel(%arg0: i32, %arg1: memref<8x784xf32, #tpu.memory_space<vmem>>, %arg2: memref<784x128xf32, #tpu.memory_space<vmem>>, %arg3: memref<1x128xf32, #tpu.memory_space<vmem>>, %arg4: memref<128x64xf32, #tpu.memory_space<vmem>>, %arg5: memref<1x64xf32, #tpu.memory_space<vmem>>, %arg6: memref<64x32xf32, #tpu.memory_space<vmem>>, %arg7: memref<1x32xf32, #tpu.memory_space<vmem>>, %arg8: memref<32x128xf32, #tpu.memory_space<vmem>>, %arg9: memref<1x128xf32, #tpu.memory_space<vmem>>, %arg10: memref<8x128xf32, #tpu.memory_space<vmem>>) attributes {dimension_semantics = [#tpu.dimension_semantics<parallel>], iteration_bounds = array<i64: 1>, scalar_prefetch = 0 : i64, scratch_operands = 0 : i64, tpu.core_type = #tpu.core_type<tc>, window_params = [{transform_indices = @transform_0, window_bounds = array<i64: 8, 784>}, {pipeline_mode = #tpu.pipeline_mode<synchronous>, transform_indices = @transform_1, window_bounds = array<i64: 784, 128>}, {pipeline_mode = #tpu.pipeline_mode<synchronous>, transform_indices = @transform_2, window_bounds = array<i64: 1, 128>}, {pipeline_mode = #tpu.pipeline_mode<synchronous>, transform_indices = @transform_3, window_bounds = array<i64: 128, 64>}, {pipeline_mode = #tpu.pipeline_mode<synchronous>, transform_indices = @transform_4, window_bounds = array<i64: 1, 64>}, {pipeline_mode = #tpu.pipeline_mode<synchronous>, transform_indices = @transform_5, window_bounds = array<i64: 64, 32>}, {pipeline_mode = #tpu.pipeline_mode<synchronous>, transform_indices = @transform_6, window_bounds = array<i64: 1, 32>}, {pipeline_mode = #tpu.pipeline_mode<synchronous>, transform_indices = @transform_7, window_bounds = array<i64: 32, 128>}, {pipeline_mode = #tpu.pipeline_mode<synchronous>, transform_indices = @transform_8, window_bounds = array<i64: 1, 128>}, {transform_indices = @transform_9, window_bounds = array<i64: 8, 128>}]} {
    %c0 = arith.constant 0 : index
    %c0_0 = arith.constant 0 : index
    %0 = vector.load %arg1[%c0, %c0_0] : memref<8x784xf32, #tpu.memory_space<vmem>>, vector<8x784xf32>
    %c0_1 = arith.constant 0 : index
    %c0_2 = arith.constant 0 : index
    %1 = vector.load %arg2[%c0_1, %c0_2] : memref<784x128xf32, #tpu.memory_space<vmem>>, vector<784x128xf32>
    %cst = arith.constant dense<0.000000e+00> : vector<8x128xf32>
    %2 = tpu.matmul %0, %1, %cst {dimension_numbers = #tpu.dot_dimension_numbers<[1], [0], [0], [1], [0, 0, 1, 1], [], []>} : vector<8x784xf32>, vector<784x128xf32>, vector<8x128xf32> -> vector<8x128xf32>
    %c0_3 = arith.constant 0 : index
    %c0_4 = arith.constant 0 : index
    %3 = vector.load %arg3[%c0_3, %c0_4] : memref<1x128xf32, #tpu.memory_space<vmem>>, vector<1x128xf32>
    %4 = vector.broadcast %3 : vector<1x128xf32> to vector<8x128xf32>
    %5 = arith.addf %2, %4 : vector<8x128xf32>
    %cst_5 = arith.constant 0.000000e+00 : f32
    %6 = vector.broadcast %cst_5 : f32 to vector<8x128xf32>
    %7 = arith.maximumf %5, %6 : vector<8x128xf32>
    %c0_6 = arith.constant 0 : index
    %c0_7 = arith.constant 0 : index
    %8 = vector.load %arg4[%c0_6, %c0_7] : memref<128x64xf32, #tpu.memory_space<vmem>>, vector<128x64xf32>
    %cst_8 = arith.constant dense<0.000000e+00> : vector<8x64xf32>
    %9 = tpu.matmul %7, %8, %cst_8 {dimension_numbers = #tpu.dot_dimension_numbers<[1], [0], [0], [1], [0, 0, 1, 1], [], []>} : vector<8x128xf32>, vector<128x64xf32>, vector<8x64xf32> -> vector<8x64xf32>
    %c0_9 = arith.constant 0 : index
    %c0_10 = arith.constant 0 : index
    %10 = vector.load %arg5[%c0_9, %c0_10] : memref<1x64xf32, #tpu.memory_space<vmem>>, vector<1x64xf32>
    %11 = vector.broadcast %10 : vector<1x64xf32> to vector<8x64xf32>
    %12 = arith.addf %9, %11 : vector<8x64xf32>
    %cst_11 = arith.constant 0.000000e+00 : f32
    %13 = vector.broadcast %cst_11 : f32 to vector<8x64xf32>
    %14 = arith.maximumf %12, %13 : vector<8x64xf32>
    %c0_12 = arith.constant 0 : index
    %c0_13 = arith.constant 0 : index
    %15 = vector.load %arg6[%c0_12, %c0_13] : memref<64x32xf32, #tpu.memory_space<vmem>>, vector<64x32xf32>
    %cst_14 = arith.constant dense<0.000000e+00> : vector<8x32xf32>
    %16 = tpu.matmul %14, %15, %cst_14 {dimension_numbers = #tpu.dot_dimension_numbers<[1], [0], [0], [1], [0, 0, 1, 1], [], []>} : vector<8x64xf32>, vector<64x32xf32>, vector<8x32xf32> -> vector<8x32xf32>
    %c0_15 = arith.constant 0 : index
    %c0_16 = arith.constant 0 : index
    %17 = vector.load %arg7[%c0_15, %c0_16] : memref<1x32xf32, #tpu.memory_space<vmem>>, vector<1x32xf32>
    %18 = vector.broadcast %17 : vector<1x32xf32> to vector<8x32xf32>
    %19 = arith.addf %16, %18 : vector<8x32xf32>
    %cst_17 = arith.constant 0.000000e+00 : f32
    %20 = vector.broadcast %cst_17 : f32 to vector<8x32xf32>
    %21 = arith.maximumf %19, %20 : vector<8x32xf32>
    %c0_18 = arith.constant 0 : index
    %c0_19 = arith.constant 0 : index
    %22 = vector.load %arg8[%c0_18, %c0_19] : memref<32x128xf32, #tpu.memory_space<vmem>>, vector<32x128xf32>
    %cst_20 = arith.constant dense<0.000000e+00> : vector<8x128xf32>
    %23 = tpu.matmul %21, %22, %cst_20 {dimension_numbers = #tpu.dot_dimension_numbers<[1], [0], [0], [1], [0, 0, 1, 1], [], []>} : vector<8x32xf32>, vector<32x128xf32>, vector<8x128xf32> -> vector<8x128xf32>
    %c0_21 = arith.constant 0 : index
    %c0_22 = arith.constant 0 : index
    %24 = vector.load %arg9[%c0_21, %c0_22] : memref<1x128xf32, #tpu.memory_space<vmem>>, vector<1x128xf32>
    %25 = vector.broadcast %24 : vector<1x128xf32> to vector<8x128xf32>
    %26 = arith.addf %23, %25 : vector<8x128xf32>
    %cst_23 = arith.constant 0.000000e+00 : f32
    %27 = vector.broadcast %cst_23 : f32 to vector<8x128xf32>
    %28 = arith.maximumf %26, %27 : vector<8x128xf32>
    %c0_24 = arith.constant 0 : index
    %c0_25 = arith.constant 0 : index
    %29 = vector.load %arg10[%c0_24, %c0_25] : memref<8x128xf32, #tpu.memory_space<vmem>>, vector<8x128xf32>
    tpu.vector_store %arg10[%c0_24, %c0_25], %28 {strides = array<i32>} : memref<8x128xf32, #tpu.memory_space<vmem>>, vector<8x128xf32>,
    return
  }
  func.func @transform_0(%arg0: i32) -> (i32, i32) {
    %c0_i32 = arith.constant 0 : i32
    %c0_i32_0 = arith.constant 0 : i32
    return %arg0, %c0_i32 : i32, i32
  }
  func.func @transform_1(%arg0: i32) -> (i32, i32) {
    %c0_i32 = arith.constant 0 : i32
    %c0_i32_0 = arith.constant 0 : i32
    %c0_i32_1 = arith.constant 0 : i32
    return %c0_i32, %c0_i32_0 : i32, i32
  }
  func.func @transform_2(%arg0: i32) -> (i32, i32) {
    %c0_i32 = arith.constant 0 : i32
    %c0_i32_0 = arith.constant 0 : i32
    %c0_i32_1 = arith.constant 0 : i32
    return %c0_i32, %c0_i32_0 : i32, i32
  }
  func.func @transform_3(%arg0: i32) -> (i32, i32) {
    %c0_i32 = arith.constant 0 : i32
    %c0_i32_0 = arith.constant 0 : i32
    %c0_i32_1 = arith.constant 0 : i32
    return %c0_i32, %c0_i32_0 : i32, i32
  }
  func.func @transform_4(%arg0: i32) -> (i32, i32) {
    %c0_i32 = arith.constant 0 : i32
    %c0_i32_0 = arith.constant 0 : i32
    %c0_i32_1 = arith.constant 0 : i32
    return %c0_i32, %c0_i32_0 : i32, i32
  }
  func.func @transform_5(%arg0: i32) -> (i32, i32) {
    %c0_i32 = arith.constant 0 : i32
    %c0_i32_0 = arith.constant 0 : i32
    %c0_i32_1 = arith.constant 0 : i32
    return %c0_i32, %c0_i32_0 : i32, i32
  }
  func.func @transform_6(%arg0: i32) -> (i32, i32) {
    %c0_i32 = arith.constant 0 : i32
    %c0_i32_0 = arith.constant 0 : i32
    %c0_i32_1 = arith.constant 0 : i32
    return %c0_i32, %c0_i32_0 : i32, i32
  }
  func.func @transform_7(%arg0: i32) -> (i32, i32) {
    %c0_i32 = arith.constant 0 : i32
    %c0_i32_0 = arith.constant 0 : i32
    %c0_i32_1 = arith.constant 0 : i32
    return %c0_i32, %c0_i32_0 : i32, i32
  }
  func.func @transform_8(%arg0: i32) -> (i32, i32) {
    %c0_i32 = arith.constant 0 : i32
    %c0_i32_0 = arith.constant 0 : i32
    %c0_i32_1 = arith.constant 0 : i32
    return %c0_i32, %c0_i32_0 : i32, i32
  }
  func.func @transform_9(%arg0: i32) -> (i32, i32) {
    %c0_i32 = arith.constant 0 : i32
    %c0_i32_0 = arith.constant 0 : i32
    return %arg0, %c0_i32 : i32, i32
  }
}

</mosaic_0001>

<llo_original>
// kernel: tpu_custom_call.1
$region0: #{tpu_custom_call.1}
  #allocation0 [shape = 'u32[]', space=smem, size = 0x4, offset = 0x4, fixed_abs, tag = 'smem constant byte address 0x4 - core index']
  #allocation1 [shape = 'u32[144,128]{1,0:T(1,128)}', space=vmem, size = 0x12000, scoped, tag = 'internal scratch']
  %s0 = inlined_call_operand.vmem [shape: f32[8,784], index: 0, kind: input, shape index: {}]
  %s1 = inlined_call_operand.hbm [shape: f32[784,128], index: 1, kind: input, shape index: {}]
  %s2 = inlined_call_operand.vmem [shape: f32[1,128], index: 2, kind: input, shape index: {}]
  %s3 = inlined_call_operand.vmem [shape: f32[128,64], index: 3, kind: input, shape index: {}]
  %s4 = inlined_call_operand.vmem [shape: f32[1,64], index: 4, kind: input, shape index: {}]
  %s5 = inlined_call_operand.vmem [shape: f32[64,32], index: 5, kind: input, shape index: {}]
  %s6 = inlined_call_operand.vmem [shape: f32[1,32], index: 6, kind: input, shape index: {}]
  %s7 = inlined_call_operand.vmem [shape: f32[32,128], index: 7, kind: input, shape index: {}]
  %s8 = inlined_call_operand.vmem [shape: f32[1,128], index: 8, kind: input, shape index: {}]
  %s9 = inlined_call_operand.hbm [shape: f32[8,128], index: 9, kind: output, shape index: {}]
  %s10 = sld [smem:[#allocation0]]
  $region50: #{tpu_custom_call.1} parent=0
    _
  %s12 = ssub.s32 1, %s10
  %s13 = scalar_select 0, %s12, %s10
  $region1: #{tpu_custom_call.1} parent=0
    #allocation2 [shape = 'u8[401408]{0}', space=vmem, size = 0x62000, scoped, tag = 'input window, operand 1, single buffered']
    #allocation3 [shape = 's32[1]{0}', space=sflag, size = 0x4, scoped, tag = 'scoped memory for tpu_custom_call.1']
    #allocation4 [shape = 's32[1]{0}', space=sflag, size = 0x4, scoped, tag = 'scoped memory for tpu_custom_call.1']
    #allocation5 [shape = 'u8[4096]{0}', space=vmem, size = 0x1000, scoped, tag = 'output window, operand 0, single buffered']
    %14 = vsyncpa [#allocation3], 0
    %15 = vsyncpa [#allocation4], 0
    // Predicated region
    $region2: #{tpu_custom_call.1} parent=1 // pred_check
      _
    $region3: #{tpu_custom_call.1} parent=1 // pred_check_branch
      %17 = sbr.rel (0) target = $region5
    $region4: #{tpu_custom_call.1} parent=1 // pred_region
      _
    $region5: #{tpu_custom_call.1} parent=1 // pred_fallthru
      _
    // Predicated region
    $region6: #{tpu_custom_call.1} parent=1 // pred_check
      _
    $region7: #{tpu_custom_call.1} parent=1 // pred_check_branch
      %19 = sbr.rel (0) target = $region9
    $region8: #{tpu_custom_call.1} parent=1 // pred_region
      %s21 = ssub.s32 12544, 12544
      %22 = vsyncadd [#allocation3], %s21
      %s23 = sshll.u32 [#allocation2], 4
      %s24 = int_to_ptr.vmem [resolvable:$true] %s23
      %29 = dma.hbm_to_vmem [thread:$0]  %s1, 12544, %s24, [#allocation3], 128, 128, 8
    $region9: #{tpu_custom_call.1} parent=1 // pred_fallthru
      _
    // Predicated region
    $region10: #{tpu_custom_call.1} parent=1 // pred_check
      _
    $region11: #{tpu_custom_call.1} parent=1 // pred_check_branch
      %31 = sbr.rel (0) target = $region13
    $region12: #{tpu_custom_call.1} parent=1 // pred_region
      _
    $region13: #{tpu_custom_call.1} parent=1 // pred_fallthru
      _
    // Predicated region
    $region14: #{tpu_custom_call.1} parent=1 // pred_check
      _
    $region15: #{tpu_custom_call.1} parent=1 // pred_check_branch
      %33 = sbr.rel (0) target = $region17
    $region16: #{tpu_custom_call.1} parent=1 // pred_region
      _
    $region17: #{tpu_custom_call.1} parent=1 // pred_fallthru
      _
    // Predicated region
    $region18: #{tpu_custom_call.1} parent=1 // pred_check
      _
    $region19: #{tpu_custom_call.1} parent=1 // pred_check_branch
      %35 = sbr.rel (0) target = $region21
    $region20: #{tpu_custom_call.1} parent=1 // pred_region
      _
    $region21: #{tpu_custom_call.1} parent=1 // pred_fallthru
      _
    // Predicated region
    $region22: #{tpu_custom_call.1} parent=1 // pred_check
      _
    $region23: #{tpu_custom_call.1} parent=1 // pred_check_branch
      %37 = sbr.rel (0) target = $region25
    $region24: #{tpu_custom_call.1} parent=1 // pred_region
      _
    $region25: #{tpu_custom_call.1} parent=1 // pred_fallthru
      _
    // Predicated region
    $region26: #{tpu_custom_call.1} parent=1 // pred_check
      _
    $region27: #{tpu_custom_call.1} parent=1 // pred_check_branch
      %39 = sbr.rel (0) target = $region29
    $region28: #{tpu_custom_call.1} parent=1 // pred_region
      _
    $region29: #{tpu_custom_call.1} parent=1 // pred_fallthru
      _
    // Predicated region
    $region30: #{tpu_custom_call.1} parent=1 // pred_check
      _
    $region31: #{tpu_custom_call.1} parent=1 // pred_check_branch
      %41 = sbr.rel (0) target = $region33
    $region32: #{tpu_custom_call.1} parent=1 // pred_region
      _
    $region33: #{tpu_custom_call.1} parent=1 // pred_fallthru
      _
    // Predicated region
    $region34: #{tpu_custom_call.1} parent=1 // pred_check
      _
    $region35: #{tpu_custom_call.1} parent=1 // pred_check_branch
      %43 = sbr.rel (0) target = $region37
    $region36: #{tpu_custom_call.1} parent=1 // pred_region
      _
    $region37: #{tpu_custom_call.1} parent=1 // pred_fallthru
      _
    // Predicated region
    $region38: #{tpu_custom_call.1} parent=1 // pred_check
      _
    $region39: #{tpu_custom_call.1} parent=1 // pred_check_branch
      %45 = sbr.rel (0) target = $region41
    $region40: #{tpu_custom_call.1} parent=1 // pred_region
      %46 = dma.done [#allocation3], 12544
    $region41: #{tpu_custom_call.1} parent=1 // pred_fallthru
      _
    %v47 = vld [vmem:[%s0] sm:$0xff]
    %v48 = vld [vmem:[%s0 + $0x8] sm:$0xff]
    %v49 = vld [vmem:[%s0 + $0x10] sm:$0xff]
    %v50 = vld [vmem:[%s0 + $0x18] sm:$0xff]
    %v51 = vld [vmem:[%s0 + $0x20] sm:$0xff]
    %v52 = vld [vmem:[%s0 + $0x28] sm:$0xff]
    %v53 = vld [vmem:[%s0 + $0x30] sm:$0xff]
    %v54 = vld [vmem:[#allocation2] sm:$0xff]
    %v55 = vld [vmem:[#allocation2 + $0x8] sm:$0xff]
    %v56 = vld [vmem:[#allocation2 + $0x10] sm:$0xff]
    %v57 = vld [vmem:[#allocation2 + $0x18] sm:$0xff]
    %v58 = vld [vmem:[#allocation2 + $0x20] sm:$0xff]
    %v59 = vld [vmem:[#allocation2 + $0x28] sm:$0xff]
    %v60 = vld [vmem:[#allocation2 + $0x30] sm:$0xff]
    %v61 = vld [vmem:[#allocation2 + $0x38] sm:$0xff]
    %v62 = vld [vmem:[#allocation2 + $0x40] sm:$0xff]
    %v63 = vld [vmem:[#allocation2 + $0x48] sm:$0xff]
    %v64 = vld [vmem:[#allocation2 + $0x50] sm:$0xff]
    %v65 = vld [vmem:[#allocation2 + $0x58] sm:$0xff]
    %v66 = vld [vmem:[#allocation2 + $0x60] sm:$0xff]
    %v67 = vld [vmem:[#allocation2 + $0x68] sm:$0xff]
    %v68 = vld [vmem:[#allocation2 + $0x70] sm:$0xff]
    %v69 = vld [vmem:[#allocation2 + $0x78] sm:$0xff]
    %v70 = vld [vmem:[#allocation2 + $0x80] sm:$0xff]
    %v71 = vld [vmem:[#allocation2 + $0x88] sm:$0xff]
    %v72 = vld [vmem:[#allocation2 + $0x90] sm:$0xff]
    %v73 = vld [vmem:[#allocation2 + $0x98] sm:$0xff]
    %v74 = vld [vmem:[#allocation2 + $0xa0] sm:$0xff]
    %v75 = vld [vmem:[#allocation2 + $0xa8] sm:$0xff]
    %v76 = vld [vmem:[#allocation2 + $0xb0] sm:$0xff]
    %v77 = vld [vmem:[#allocation2 + $0xb8] sm:$0xff]
    %v78 = vld [vmem:[#allocation2 + $0xc0] sm:$0xff]
    %v79 = vld [vmem:[#allocation2 + $0xc8] sm:$0xff]
    %v80 = vld [vmem:[#allocation2 + $0xd0] sm:$0xff]
    %v81 = vld [vmem:[#allocation2 + $0xd8] sm:$0xff]
    %v82 = vld [vmem:[#allocation2 + $0xe0] sm:$0xff]
    %v83 = vld [vmem:[#allocation2 + $0xe8] sm:$0xff]
    %v84 = vld [vmem:[#allocation2 + $0xf0] sm:$0xff]
    %v85 = vld [vmem:[#allocation2 + $0xf8] sm:$0xff]
    %v86 = vld [vmem:[#allocation2 + $0x100] sm:$0xff]
    %v87 = vld [vmem:[#allocation2 + $0x108] sm:$0xff]
    %v88 = vld [vmem:[#allocation2 + $0x110] sm:$0xff]
    %v89 = vld [vmem:[#allocation2 + $0x118] sm:$0xff]
    %v90 = vld [vmem:[#allocation2 + $0x120] sm:$0xff]
    %v91 = vld [vmem:[#allocation2 + $0x128] sm:$0xff]
    %v92 = vld [vmem:[#allocation2 + $0x130] sm:$0xff]
    %v93 = vld [vmem:[#allocation2 + $0x138] sm:$0xff]
    %v94 = vld [vmem:[#allocation2 + $0x140] sm:$0xff]
    %v95 = vld [vmem:[#allocation2 + $0x148] sm:$0xff]
    %v96 = vld [vmem:[#allocation2 + $0x150] sm:$0xff]
    %v97 = vld [vmem:[#allocation2 + $0x158] sm:$0xff]
    %v98 = vld [vmem:[#allocation2 + $0x160] sm:$0xff]
    %v99 = vld [vmem:[#allocation2 + $0x168] sm:$0xff]
    %v100 = vld [vmem:[#allocation2 + $0x170] sm:$0xff]
    %v101 = vld [vmem:[#allocation2 + $0x178] sm:$0xff]
    %v102 = vld [vmem:[#allocation2 + $0x180] sm:$0xff]
    %v103 = vld [vmem:[#allocation2 + $0x188] sm:$0xff]
    %v104 = vld [vmem:[#allocation2 + $0x190] sm:$0xff]
    %v105 = vld [vmem:[#allocation2 + $0x198] sm:$0xff]
    %v106 = vld [vmem:[#allocation2 + $0x1a0] sm:$0xff]
    %v107 = vld [vmem:[#allocation2 + $0x1a8] sm:$0xff]
    %v108 = vld [vmem:[#allocation2 + $0x1b0] sm:$0xff]
    %v109 = vld [vmem:[#allocation2 + $0x1b8] sm:$0xff]
    %v110 = vld [vmem:[#allocation2 + $0x1c0] sm:$0xff]
    %v111 = vld [vmem:[#allocation2 + $0x1c8] sm:$0xff]
    %v112 = vld [vmem:[#allocation2 + $0x1d0] sm:$0xff]
    %v113 = vld [vmem:[#allocation2 + $0x1d8] sm:$0xff]
    %v114 = vld [vmem:[#allocation2 + $0x1e0] sm:$0xff]
    %v115 = vld [vmem:[#allocation2 + $0x1e8] sm:$0xff]
    %v116 = vld [vmem:[#allocation2 + $0x1f0] sm:$0xff]
    %v117 = vld [vmem:[#allocation2 + $0x1f8] sm:$0xff]
    %v118 = vld [vmem:[#allocation2 + $0x200] sm:$0xff]
    %v119 = vld [vmem:[#allocation2 + $0x208] sm:$0xff]
    %v120 = vld [vmem:[#allocation2 + $0x210] sm:$0xff]
    %v121 = vld [vmem:[#allocation2 + $0x218] sm:$0xff]
    %v122 = vld [vmem:[#allocation2 + $0x220] sm:$0xff]
    %v123 = vld [vmem:[#allocation2 + $0x228] sm:$0xff]
    %v124 = vld [vmem:[#allocation2 + $0x230] sm:$0xff]
    %v125 = vld [vmem:[#allocation2 + $0x238] sm:$0xff]
    %v126 = vld [vmem:[#allocation2 + $0x240] sm:$0xff]
    %v127 = vld [vmem:[#allocation2 + $0x248] sm:$0xff]
    %v128 = vld [vmem:[#allocation2 + $0x250] sm:$0xff]
    %v129 = vld [vmem:[#allocation2 + $0x258] sm:$0xff]
    %v130 = vld [vmem:[#allocation2 + $0x260] sm:$0xff]
    %v131 = vld [vmem:[#allocation2 + $0x268] sm:$0xff]
    %v132 = vld [vmem:[#allocation2 + $0x270] sm:$0xff]
    %v133 = vld [vmem:[#allocation2 + $0x278] sm:$0xff]
    %v134 = vld [vmem:[#allocation2 + $0x280] sm:$0xff]
    %v135 = vld [vmem:[#allocation2 + $0x288] sm:$0xff]
    %v136 = vld [vmem:[#allocation2 + $0x290] sm:$0xff]
    %v137 = vld [vmem:[#allocation2 + $0x298] sm:$0xff]
    %v138 = vld [vmem:[#allocation2 + $0x2a0] sm:$0xff]
    %v139 = vld [vmem:[#allocation2 + $0x2a8] sm:$0xff]
    %v140 = vld [vmem:[#allocation2 + $0x2b0] sm:$0xff]
    %v141 = vld [vmem:[#allocation2 + $0x2b8] sm:$0xff]
    %v142 = vld [vmem:[#allocation2 + $0x2c0] sm:$0xff]
    %v143 = vld [vmem:[#allocation2 + $0x2c8] sm:$0xff]
    %v144 = vld [vmem:[#allocation2 + $0x2d0] sm:$0xff]
    %v145 = vld [vmem:[#allocation2 + $0x2d8] sm:$0xff]
    %v146 = vld [vmem:[#allocation2 + $0x2e0] sm:$0xff]
    %v147 = vld [vmem:[#allocation2 + $0x2e8] sm:$0xff]
    %v148 = vld [vmem:[#allocation2 + $0x2f0] sm:$0xff]
    %v149 = vld [vmem:[#allocation2 + $0x2f8] sm:$0xff]
    %v150 = vld [vmem:[#allocation2 + $0x300] sm:$0xff]
    %v151 = vld [vmem:[#allocation2 + $0x308] sm:$0xff]
    %v152 = vld [vmem:[%s2] sm:$0x1]
    %v154 = vlaneseq
    %v155 = vshrl.u32 %v154, 7
    %v156 = vsub.s32 0, %v155
    %v157 = vrot.slane %v152, %v156
    %vm159 = vcmask 130048
    %v161 = vsel %vm159, %v53, 0
    %163 = vmatprep.subr.mxu0 0.0
    %164 = vmatpush1.msra.mxu0 %v54
    %165 = vmatprep.subr.mxu0 0.0
    %166 = vmatpush1.msra.mxu0 %v55
    %167 = vmatprep.subr.mxu0 0.0
    %168 = vmatpush1.msra.mxu0 %v56
    %169 = vmatprep.subr.mxu0 0.0
    %170 = vmatpush1.msra.mxu0 %v57
    %171 = vmatprep.subr.mxu0 0.0
    %172 = vmatpush1.msra.mxu0 %v58
    %173 = vmatprep.subr.mxu0 0.0
    %174 = vmatpush1.msra.mxu0 %v59
    %175 = vmatprep.subr.mxu0 0.0
    %176 = vmatpush1.msra.mxu0 %v60
    %177 = vmatprep.subr.mxu0 0.0
    %178 = vmatpush1.msra.mxu0 %v61
    %179 = vmatprep.subr.mxu0 0.0
    %180 = vmatpush1.msra.mxu0 %v62
    %181 = vmatprep.subr.mxu0 0.0
    %182 = vmatpush1.msra.mxu0 %v63
    %183 = vmatprep.subr.mxu0 0.0
    %184 = vmatpush1.msra.mxu0 %v64
    %185 = vmatprep.subr.mxu0 0.0
    %186 = vmatpush1.msra.mxu0 %v65
    %187 = vmatprep.subr.mxu0 0.0
    %188 = vmatpush1.msra.mxu0 %v66
    %189 = vmatprep.subr.mxu0 0.0
    %190 = vmatpush1.msra.mxu0 %v67
    %191 = vmatprep.subr.mxu0 0.0
    %192 = vmatpush1.msra.mxu0 %v68
    %193 = vmatprep.subr.mxu0 0.0
    %194 = vmatpush1.msra.mxu0 %v69
    %195 = vmatprep.subr.mxu0 0.0
    %196 = vmatpush1.msra.mxu0 %v70
    %197 = vmatprep.subr.mxu0 0.0
    %198 = vmatpush1.msra.mxu0 %v71
    %199 = vmatprep.subr.mxu0 0.0
    %200 = vmatpush1.msra.mxu0 %v72
    %201 = vmatprep.subr.mxu0 0.0
    %202 = vmatpush1.msra.mxu0 %v73
    %203 = vmatprep.subr.mxu0 0.0
    %204 = vmatpush1.msra.mxu0 %v74
    %205 = vmatprep.subr.mxu0 0.0
    %206 = vmatpush1.msra.mxu0 %v75
    %207 = vmatprep.subr.mxu0 0.0
    %208 = vmatpush1.msra.mxu0 %v76
    %209 = vmatprep.subr.mxu0 0.0
    %210 = vmatpush1.msra.mxu0 %v77
    %211 = vmatprep.subr.mxu0 0.0
    %212 = vmatpush1.msra.mxu0 %v78
    %213 = vmatprep.subr.mxu0 0.0
    %214 = vmatpush1.msra.mxu0 %v79
    %215 = vmatprep.subr.mxu0 0.0
    %216 = vmatpush1.msra.mxu0 %v80
    %217 = vmatprep.subr.mxu0 0.0
    %218 = vmatpush1.msra.mxu0 %v81
    %219 = vmatprep.subr.mxu0 0.0
    %220 = vmatpush1.msra.mxu0 %v82
    %221 = vmatprep.subr.mxu0 0.0
    %222 = vmatpush1.msra.mxu0 %v83
    %223 = vmatprep.subr.mxu0 0.0
    %224 = vmatpush1.msra.mxu0 %v84
    %225 = vmatprep.subr.mxu0 0.0
    %226 = vmatpush1.msra.mxu0 %v85
    %227 = vmatprep.mubr.f32.mxu0 %v48
    %228 = vmatmul.mubr.f32.gmra.mrb[0].mxu0 %v47
    %v229 = vpop.f32.mrb[0].mxu0
    %v230 = vadd.f32 %v157, %v229
    %v231 = vpop.f32.mrb[0].mxu0
    %232 = vdwg.mxu0
    %233 = vmatprep.subr.mxu0 0.0
    %234 = vmatpush1.msra.mxu0 %v86
    %235 = vmatprep.subr.mxu0 0.0
    %236 = vmatpush1.msra.mxu0 %v87
    %237 = vmatprep.subr.mxu0 0.0
    %238 = vmatpush1.msra.mxu0 %v88
    %239 = vmatprep.subr.mxu0 0.0
    %240 = vmatpush1.msra.mxu0 %v89
    %241 = vmatprep.subr.mxu0 0.0
    %242 = vmatpush1.msra.mxu0 %v90
    %243 = vmatprep.subr.mxu0 0.0
    %244 = vmatpush1.msra.mxu0 %v91
    %245 = vmatprep.subr.mxu0 0.0
    %246 = vmatpush1.msra.mxu0 %v92
    %247 = vmatprep.subr.mxu0 0.0
    %248 = vmatpush1.msra.mxu0 %v93
    %249 = vmatprep.subr.mxu0 0.0
    %250 = vmatpush1.msra.mxu0 %v94
    %251 = vmatprep.subr.mxu0 0.0
    %252 = vmatpush1.msra.mxu0 %v95
    %253 = vmatprep.subr.mxu0 0.0
    %254 = vmatpush1.msra.mxu0 %v96
    %255 = vmatprep.subr.mxu0 0.0
    %256 = vmatpush1.msra.mxu0 %v97
    %257 = vmatprep.subr.mxu0 0.0
    %258 = vmatpush1.msra.mxu0 %v98
    %259 = vmatprep.subr.mxu0 0.0
    %260 = vmatpush1.msra.mxu0 %v99
    %261 = vmatprep.subr.mxu0 0.0
    %262 = vmatpush1.msra.mxu0 %v100
    %263 = vmatprep.subr.mxu0 0.0
    %264 = vmatpush1.msra.mxu0 %v101
    %265 = vmatprep.subr.mxu0 0.0
    %266 = vmatpush1.msra.mxu0 %v102
    %267 = vmatprep.subr.mxu0 0.0
    %268 = vmatpush1.msra.mxu0 %v103
    %269 = vmatprep.subr.mxu0 0.0
    %270 = vmatpush1.msra.mxu0 %v104
    %271 = vmatprep.subr.mxu0 0.0
    %272 = vmatpush1.msra.mxu0 %v105
    %273 = vmatprep.subr.mxu0 0.0
    %274 = vmatpush1.msra.mxu0 %v106
    %275 = vmatprep.subr.mxu0 0.0
    %276 = vmatpush1.msra.mxu0 %v107
    %277 = vmatprep.subr.mxu0 0.0
    %278 = vmatpush1.msra.mxu0 %v108
    %279 = vmatprep.subr.mxu0 0.0
    %280 = vmatpush1.msra.mxu0 %v109
    %281 = vmatprep.subr.mxu0 0.0
    %282 = vmatpush1.msra.mxu0 %v110
    %283 = vmatprep.subr.mxu0 0.0
    %284 = vmatpush1.msra.mxu0 %v111
    %285 = vmatprep.subr.mxu0 0.0
    %286 = vmatpush1.msra.mxu0 %v112
    %287 = vmatprep.subr.mxu0 0.0
    %288 = vmatpush1.msra.mxu0 %v113
    %289 = vmatprep.subr.mxu0 0.0
    %290 = vmatpush1.msra.mxu0 %v114
    %291 = vmatprep.subr.mxu0 0.0
    %292 = vmatpush1.msra.mxu0 %v115
    %293 = vmatprep.subr.mxu0 0.0
    %294 = vmatpush1.msra.mxu0 %v116
    %295 = vmatprep.subr.mxu0 0.0
    %296 = vmatpush1.msra.mxu0 %v117
    %297 = vmatprep.mubr.f32.mxu0 %v50
    %298 = vmatmul.mubr.f32.gmra.mrb[0].mxu0 %v49
    %v299 = vpop.f32.mrb[0].mxu0
    %v300 = vadd.f32 %v230, %v299
    %v301 = vpop.f32.mrb[0].mxu0
    %302 = vdwg.mxu0
    %303 = vmatprep.subr.mxu0 0.0
    %304 = vmatpush1.msra.mxu0 %v118
    %305 = vmatprep.subr.mxu0 0.0
    %306 = vmatpush1.msra.mxu0 %v119
    %307 = vmatprep.subr.mxu0 0.0
    %308 = vmatpush1.msra.mxu0 %v120
    %309 = vmatprep.subr.mxu0 0.0
    %310 = vmatpush1.msra.mxu0 %v121
    %311 = vmatprep.subr.mxu0 0.0
    %312 = vmatpush1.msra.mxu0 %v122
    %313 = vmatprep.subr.mxu0 0.0
    %314 = vmatpush1.msra.mxu0 %v123
    %315 = vmatprep.subr.mxu0 0.0
    %316 = vmatpush1.msra.mxu0 %v124
    %317 = vmatprep.subr.mxu0 0.0
    %318 = vmatpush1.msra.mxu0 %v125
    %319 = vmatprep.subr.mxu0 0.0
    %320 = vmatpush1.msra.mxu0 %v126
    %321 = vmatprep.subr.mxu0 0.0
    %322 = vmatpush1.msra.mxu0 %v127
    %323 = vmatprep.subr.mxu0 0.0
    %324 = vmatpush1.msra.mxu0 %v128
    %325 = vmatprep.subr.mxu0 0.0
    %326 = vmatpush1.msra.mxu0 %v129
    %327 = vmatprep.subr.mxu0 0.0
    %328 = vmatpush1.msra.mxu0 %v130
    %329 = vmatprep.subr.mxu0 0.0
    %330 = vmatpush1.msra.mxu0 %v131
    %331 = vmatprep.subr.mxu0 0.0
    %332 = vmatpush1.msra.mxu0 %v132
    %333 = vmatprep.subr.mxu0 0.0
    %334 = vmatpush1.msra.mxu0 %v133
    %335 = vmatprep.subr.mxu0 0.0
    %336 = vmatpush1.msra.mxu0 %v134
    %337 = vmatprep.subr.mxu0 0.0
    %338 = vmatpush1.msra.mxu0 %v135
    %339 = vmatprep.subr.mxu0 0.0
    %340 = vmatpush1.msra.mxu0 %v136
    %341 = vmatprep.subr.mxu0 0.0
    %342 = vmatpush1.msra.mxu0 %v137
    %343 = vmatprep.subr.mxu0 0.0
    %344 = vmatpush1.msra.mxu0 %v138
    %345 = vmatprep.subr.mxu0 0.0
    %346 = vmatpush1.msra.mxu0 %v139
    %347 = vmatprep.subr.mxu0 0.0
    %348 = vmatpush1.msra.mxu0 %v140
    %349 = vmatprep.subr.mxu0 0.0
    %350 = vmatpush1.msra.mxu0 %v141
    %351 = vmatprep.subr.mxu0 0.0
    %352 = vmatpush1.msra.mxu0 %v142
    %353 = vmatprep.subr.mxu0 0.0
    %354 = vmatpush1.msra.mxu0 %v143
    %355 = vmatprep.subr.mxu0 0.0
    %356 = vmatpush1.msra.mxu0 %v144
    %357 = vmatprep.subr.mxu0 0.0
    %358 = vmatpush1.msra.mxu0 %v145
    %359 = vmatprep.subr.mxu0 0.0
    %360 = vmatpush1.msra.mxu0 %v146
    %361 = vmatprep.subr.mxu0 0.0
    %362 = vmatpush1.msra.mxu0 %v147
    %363 = vmatprep.subr.mxu0 0.0
    %364 = vmatpush1.msra.mxu0 %v148
    %365 = vmatprep.subr.mxu0 0.0
    %366 = vmatpush1.msra.mxu0 %v149
    %367 = vmatprep.mubr.f32.mxu0 %v52
    %368 = vmatmul.mubr.f32.gmra.mrb[0].mxu0 %v51
    %v369 = vpop.f32.mrb[0].mxu0
    %v370 = vadd.f32 %v300, %v369
    %v371 = vpop.f32.mrb[0].mxu0
    %372 = vdwg.mxu0
    %373 = vmatprep.subr.mxu0 0.0
    %374 = vmatpush1.msra.mxu0 %v150
    %375 = vmatprep.subr.mxu0 0.0
    %376 = vmatpush1.msra.mxu0 %v151
    %377 = vmatprep.subr.mxu0 0.0
    %378 = vmatpush1.msra.mxu0 0.0
    %379 = vmatprep.subr.mxu0 0.0
    %380 = vmatpush1.msra.mxu0 0.0
    %381 = vmatprep.subr.mxu0 0.0
    %382 = vmatpush1.msra.mxu0 0.0
    %383 = vmatprep.subr.mxu0 0.0
    %384 = vmatpush1.msra.mxu0 0.0
    %385 = vmatprep.subr.mxu0 0.0
    %386 = vmatpush1.msra.mxu0 0.0
    %387 = vmatprep.subr.mxu0 0.0
    %388 = vmatpush1.msra.mxu0 0.0
    %389 = vmatprep.subr.mxu0 0.0
    %390 = vmatpush1.msra.mxu0 0.0
    %391 = vmatprep.subr.mxu0 0.0
    %392 = vmatpush1.msra.mxu0 0.0
    %393 = vmatprep.subr.mxu0 0.0
    %394 = vmatpush1.msra.mxu0 0.0
    %395 = vmatprep.subr.mxu0 0.0
    %396 = vmatpush1.msra.mxu0 0.0
    %397 = vmatprep.subr.mxu0 0.0
    %398 = vmatpush1.msra.mxu0 0.0
    %399 = vmatprep.subr.mxu0 0.0
    %400 = vmatpush1.msra.mxu0 0.0
    %401 = vmatprep.subr.mxu0 0.0
    %402 = vmatpush1.msra.mxu0 0.0
    %403 = vmatprep.subr.mxu0 0.0
    %404 = vmatpush1.msra.mxu0 0.0
    %405 = vmatprep.subr.mxu0 0.0
    %406 = vmatpush1.msra.mxu0 0.0
    %407 = vmatprep.subr.mxu0 0.0
    %408 = vmatpush1.msra.mxu0 0.0
    %409 = vmatprep.subr.mxu0 0.0
    %410 = vmatpush1.msra.mxu0 0.0
    %411 = vmatprep.subr.mxu0 0.0
    %412 = vmatpush1.msra.mxu0 0.0
    %413 = vmatprep.subr.mxu0 0.0
    %414 = vmatpush1.msra.mxu0 0.0
    %415 = vmatprep.subr.mxu0 0.0
    %416 = vmatpush1.msra.mxu0 0.0
    %417 = vmatprep.subr.mxu0 0.0
    %418 = vmatpush1.msra.mxu0 0.0
    %419 = vmatprep.subr.mxu0 0.0
    %420 = vmatpush1.msra.mxu0 0.0
    %421 = vmatprep.subr.mxu0 0.0
    %422 = vmatpush1.msra.mxu0 0.0
    %423 = vmatprep.subr.mxu0 0.0
    %424 = vmatpush1.msra.mxu0 0.0
    %425 = vmatprep.subr.mxu0 0.0
    %426 = vmatpush1.msra.mxu0 0.0
    %427 = vmatprep.subr.mxu0 0.0
    %428 = vmatpush1.msra.mxu0 0.0
    %429 = vmatprep.subr.mxu0 0.0
    %430 = vmatpush1.msra.mxu0 0.0
    %431 = vmatprep.subr.mxu0 0.0
    %432 = vmatpush1.msra.mxu0 0.0
    %433 = vmatprep.subr.mxu0 0.0
    %434 = vmatpush1.msra.mxu0 0.0
    %435 = vmatprep.subr.mxu0 0.0
    %436 = vmatpush1.msra.mxu0 0.0
    %437 = vmatprep.mubr.f32.mxu0 0.0
    %438 = vmatmul.mubr.f32.gmra.mrb[0].mxu0 %v161
    %v439 = vpop.f32.mrb[0].mxu0
    %v440 = vadd.f32 %v370, %v439
    %v441 = vpop.f32.mrb[0].mxu0
    %442 = vdwg.mxu0
    %v443 = vmax.f32 %v440, 0.0
    %v444 = vld [vmem:[%s3] sm:$0xff]
    %v445 = vld [vmem:[%s3 + $0x8] sm:$0xff]
    %v446 = vld [vmem:[%s3 + $0x10] sm:$0xff]
    %v447 = vld [vmem:[%s3 + $0x18] sm:$0xff]
    %v448 = vld [vmem:[%s3 + $0x20] sm:$0xff]
    %v449 = vld [vmem:[%s3 + $0x28] sm:$0xff]
    %v450 = vld [vmem:[%s3 + $0x30] sm:$0xff]
    %v451 = vld [vmem:[%s3 + $0x38] sm:$0xff]
    %v452 = vld [vmem:[%s3 + $0x40] sm:$0xff]
    %v453 = vld [vmem:[%s3 + $0x48] sm:$0xff]
    %v454 = vld [vmem:[%s3 + $0x50] sm:$0xff]
    %v455 = vld [vmem:[%s3 + $0x58] sm:$0xff]
    %v456 = vld [vmem:[%s3 + $0x60] sm:$0xff]
    %v457 = vld [vmem:[%s3 + $0x68] sm:$0xff]
    %v458 = vld [vmem:[%s3 + $0x70] sm:$0xff]
    %v459 = vld [vmem:[%s3 + $0x78] sm:$0xff]
    %v460 = vld [vmem:[%s4] sm:$0x1]
    %v462 = vlaneseq
    %v463 = vshrl.u32 %v462, 7
    %v464 = vsub.s32 0, %v463
    %v465 = vrot.slane %v460, %v464
    %467 = vmatprep.subr.mxu0 0.0
    %468 = vmatpush1.msra.mxu0 %v444
    %469 = vmatprep.subr.mxu0 0.0
    %470 = vmatpush1.msra.mxu0 %v445
    %471 = vmatprep.subr.mxu0 0.0
    %472 = vmatpush1.msra.mxu0 %v446
    %473 = vmatprep.subr.mxu0 0.0
    %474 = vmatpush1.msra.mxu0 %v447
    %475 = vmatprep.subr.mxu0 0.0
    %476 = vmatpush1.msra.mxu0 %v448
    %477 = vmatprep.subr.mxu0 0.0
    %478 = vmatpush1.msra.mxu0 %v449
    %479 = vmatprep.subr.mxu0 0.0
    %480 = vmatpush1.msra.mxu0 %v450
    %481 = vmatprep.subr.mxu0 0.0
    %482 = vmatpush1.msra.mxu0 %v451
    %483 = vmatprep.subr.mxu0 0.0
    %484 = vmatpush1.msra.mxu0 %v452
    %485 = vmatprep.subr.mxu0 0.0
    %486 = vmatpush1.msra.mxu0 %v453
    %487 = vmatprep.subr.mxu0 0.0
    %488 = vmatpush1.msra.mxu0 %v454
    %489 = vmatprep.subr.mxu0 0.0
    %490 = vmatpush1.msra.mxu0 %v455
    %491 = vmatprep.subr.mxu0 0.0
    %492 = vmatpush1.msra.mxu0 %v456
    %493 = vmatprep.subr.mxu0 0.0
    %494 = vmatpush1.msra.mxu0 %v457
    %495 = vmatprep.subr.mxu0 0.0
    %496 = vmatpush1.msra.mxu0 %v458
    %497 = vmatprep.subr.mxu0 0.0
    %498 = vmatpush1.msra.mxu0 %v459
    %499 = vmatprep.subr.mxu0 0.0
    %500 = vmatpush1.msra.mxu0 0.0
    %501 = vmatprep.subr.mxu0 0.0
    %502 = vmatpush1.msra.mxu0 0.0
    %503 = vmatprep.subr.mxu0 0.0
    %504 = vmatpush1.msra.mxu0 0.0
    %505 = vmatprep.subr.mxu0 0.0
    %506 = vmatpush1.msra.mxu0 0.0
    %507 = vmatprep.subr.mxu0 0.0
    %508 = vmatpush1.msra.mxu0 0.0
    %509 = vmatprep.subr.mxu0 0.0
    %510 = vmatpush1.msra.mxu0 0.0
    %511 = vmatprep.subr.mxu0 0.0
    %512 = vmatpush1.msra.mxu0 0.0
    %513 = vmatprep.subr.mxu0 0.0
    %514 = vmatpush1.msra.mxu0 0.0
    %515 = vmatprep.subr.mxu0 0.0
    %516 = vmatpush1.msra.mxu0 0.0
    %517 = vmatprep.subr.mxu0 0.0
    %518 = vmatpush1.msra.mxu0 0.0
    %519 = vmatprep.subr.mxu0 0.0
    %520 = vmatpush1.msra.mxu0 0.0
    %521 = vmatprep.subr.mxu0 0.0
    %522 = vmatpush1.msra.mxu0 0.0
    %523 = vmatprep.subr.mxu0 0.0
    %524 = vmatpush1.msra.mxu0 0.0
    %525 = vmatprep.subr.mxu0 0.0
    %526 = vmatpush1.msra.mxu0 0.0
    %527 = vmatprep.subr.mxu0 0.0
    %528 = vmatpush1.msra.mxu0 0.0
    %529 = vmatprep.subr.mxu0 0.0
    %530 = vmatpush1.msra.mxu0 0.0
    %531 = vmatprep.mubr.f32.mxu0 0.0
    %532 = vmatmul.mubr.f32.gmra.mrb[0].mxu0 %v443
    %v533 = vpop.f32.mrb[0].mxu0
    %v534 = vadd.f32 %v465, %v533
    %v535 = vpop.f32.mrb[0].mxu0
    %536 = vdwg.mxu0
    %v537 = vmax.f32 %v534, 0.0
    %v538 = vld [vmem:[%s5] sm:$0xff]
    %v539 = vld [vmem:[%s5 + $0x8] sm:$0xff]
    %v540 = vld [vmem:[%s5 + $0x10] sm:$0xff]
    %v541 = vld [vmem:[%s5 + $0x18] sm:$0xff]
    %v542 = vld [vmem:[%s5 + $0x20] sm:$0xff]
    %v543 = vld [vmem:[%s5 + $0x28] sm:$0xff]
    %v544 = vld [vmem:[%s5 + $0x30] sm:$0xff]
    %v545 = vld [vmem:[%s5 + $0x38] sm:$0xff]
    %v546 = vld [vmem:[%s6] sm:$0x1]
    %v548 = vlaneseq
    %v549 = vshrl.u32 %v548, 7
    %v550 = vsub.s32 0, %v549
    %v551 = vrot.slane %v546, %v550
    %vm553 = vcmask 523264
    %v555 = vsel %vm553, %v537, 0
    %557 = vmatprep.subr.mxu0 0.0
    %558 = vmatpush1.msra.mxu0 %v538
    %559 = vmatprep.subr.mxu0 0.0
    %560 = vmatpush1.msra.mxu0 %v539
    %561 = vmatprep.subr.mxu0 0.0
    %562 = vmatpush1.msra.mxu0 %v540
    %563 = vmatprep.subr.mxu0 0.0
    %564 = vmatpush1.msra.mxu0 %v541
    %565 = vmatprep.subr.mxu0 0.0
    %566 = vmatpush1.msra.mxu0 %v542
    %567 = vmatprep.subr.mxu0 0.0
    %568 = vmatpush1.msra.mxu0 %v543
    %569 = vmatprep.subr.mxu0 0.0
    %570 = vmatpush1.msra.mxu0 %v544
    %571 = vmatprep.subr.mxu0 0.0
    %572 = vmatpush1.msra.mxu0 %v545
    %573 = vmatprep.subr.mxu0 0.0
    %574 = vmatpush1.msra.mxu0 0.0
    %575 = vmatprep.subr.mxu0 0.0
    %576 = vmatpush1.msra.mxu0 0.0
    %577 = vmatprep.subr.mxu0 0.0
    %578 = vmatpush1.msra.mxu0 0.0
    %579 = vmatprep.subr.mxu0 0.0
    %580 = vmatpush1.msra.mxu0 0.0
    %581 = vmatprep.subr.mxu0 0.0
    %582 = vmatpush1.msra.mxu0 0.0
    %583 = vmatprep.subr.mxu0 0.0
    %584 = vmatpush1.msra.mxu0 0.0
    %585 = vmatprep.subr.mxu0 0.0
    %586 = vmatpush1.msra.mxu0 0.0
    %587 = vmatprep.subr.mxu0 0.0
    %588 = vmatpush1.msra.mxu0 0.0
    %589 = vmatprep.subr.mxu0 0.0
    %590 = vmatpush1.msra.mxu0 0.0
    %591 = vmatprep.subr.mxu0 0.0
    %592 = vmatpush1.msra.mxu0 0.0
    %593 = vmatprep.subr.mxu0 0.0
    %594 = vmatpush1.msra.mxu0 0.0
    %595 = vmatprep.subr.mxu0 0.0
    %596 = vmatpush1.msra.mxu0 0.0
    %597 = vmatprep.subr.mxu0 0.0
    %598 = vmatpush1.msra.mxu0 0.0
    %599 = vmatprep.subr.mxu0 0.0
    %600 = vmatpush1.msra.mxu0 0.0
    %601 = vmatprep.subr.mxu0 0.0
    %602 = vmatpush1.msra.mxu0 0.0
    %603 = vmatprep.subr.mxu0 0.0
    %604 = vmatpush1.msra.mxu0 0.0
    %605 = vmatprep.subr.mxu0 0.0
    %606 = vmatpush1.msra.mxu0 0.0
    %607 = vmatprep.subr.mxu0 0.0
    %608 = vmatpush1.msra.mxu0 0.0
    %609 = vmatprep.subr.mxu0 0.0
    %610 = vmatpush1.msra.mxu0 0.0
    %611 = vmatprep.subr.mxu0 0.0
    %612 = vmatpush1.msra.mxu0 0.0
    %613 = vmatprep.subr.mxu0 0.0
    %614 = vmatpush1.msra.mxu0 0.0
    %615 = vmatprep.subr.mxu0 0.0
    %616 = vmatpush1.msra.mxu0 0.0
    %617 = vmatprep.subr.mxu0 0.0
    %618 = vmatpush1.msra.mxu0 0.0
    %619 = vmatprep.subr.mxu0 0.0
    %620 = vmatpush1.msra.mxu0 0.0
    %621 = vmatprep.mubr.f32.mxu0 0.0
    %622 = vmatmul.mubr.f32.gmra.mrb[0].mxu0 %v555
    %v623 = vpop.f32.mrb[0].mxu0
    %v624 = vadd.f32 %v551, %v623
    %v625 = vpop.f32.mrb[0].mxu0
    %626 = vdwg.mxu0
    %v627 = vmax.f32 %v624, 0.0
    %v628 = vld [vmem:[%s7] sm:$0xff]
    %v629 = vld [vmem:[%s7 + $0x8] sm:$0xff]
    %v630 = vld [vmem:[%s7 + $0x10] sm:$0xff]
    %v631 = vld [vmem:[%s7 + $0x18] sm:$0xff]
    %v632 = vld [vmem:[%s8] sm:$0x1]
    %v634 = vlaneseq
    %v635 = vshrl.u32 %v634, 7
    %v636 = vsub.s32 0, %v635
    %v637 = vrot.slane %v632, %v636
    %vm639 = vcmask 261120
    %v641 = vsel %vm639, %v627, 0
    %643 = vmatprep.subr.mxu0 0.0
    %644 = vmatpush1.msra.mxu0 %v628
    %645 = vmatprep.subr.mxu0 0.0
    %646 = vmatpush1.msra.mxu0 %v629
    %647 = vmatprep.subr.mxu0 0.0
    %648 = vmatpush1.msra.mxu0 %v630
    %649 = vmatprep.subr.mxu0 0.0
    %650 = vmatpush1.msra.mxu0 %v631
    %651 = vmatprep.subr.mxu0 0.0
    %652 = vmatpush1.msra.mxu0 0.0
    %653 = vmatprep.subr.mxu0 0.0
    %654 = vmatpush1.msra.mxu0 0.0
    %655 = vmatprep.subr.mxu0 0.0
    %656 = vmatpush1.msra.mxu0 0.0
    %657 = vmatprep.subr.mxu0 0.0
    %658 = vmatpush1.msra.mxu0 0.0
    %659 = vmatprep.subr.mxu0 0.0
    %660 = vmatpush1.msra.mxu0 0.0
    %661 = vmatprep.subr.mxu0 0.0
    %662 = vmatpush1.msra.mxu0 0.0
    %663 = vmatprep.subr.mxu0 0.0
    %664 = vmatpush1.msra.mxu0 0.0
    %665 = vmatprep.subr.mxu0 0.0
    %666 = vmatpush1.msra.mxu0 0.0
    %667 = vmatprep.subr.mxu0 0.0
    %668 = vmatpush1.msra.mxu0 0.0
    %669 = vmatprep.subr.mxu0 0.0
    %670 = vmatpush1.msra.mxu0 0.0
    %671 = vmatprep.subr.mxu0 0.0
    %672 = vmatpush1.msra.mxu0 0.0
    %673 = vmatprep.subr.mxu0 0.0
    %674 = vmatpush1.msra.mxu0 0.0
    %675 = vmatprep.subr.mxu0 0.0
    %676 = vmatpush1.msra.mxu0 0.0
    %677 = vmatprep.subr.mxu0 0.0
    %678 = vmatpush1.msra.mxu0 0.0
    %679 = vmatprep.subr.mxu0 0.0
    %680 = vmatpush1.msra.mxu0 0.0
    %681 = vmatprep.subr.mxu0 0.0
    %682 = vmatpush1.msra.mxu0 0.0
    %683 = vmatprep.subr.mxu0 0.0
    %684 = vmatpush1.msra.mxu0 0.0
    %685 = vmatprep.subr.mxu0 0.0
    %686 = vmatpush1.msra.mxu0 0.0
    %687 = vmatprep.subr.mxu0 0.0
    %688 = vmatpush1.msra.mxu0 0.0
    %689 = vmatprep.subr.mxu0 0.0
    %690 = vmatpush1.msra.mxu0 0.0
    %691 = vmatprep.subr.mxu0 0.0
    %692 = vmatpush1.msra.mxu0 0.0
    %693 = vmatprep.subr.mxu0 0.0
    %694 = vmatpush1.msra.mxu0 0.0
    %695 = vmatprep.subr.mxu0 0.0
    %696 = vmatpush1.msra.mxu0 0.0
    %697 = vmatprep.subr.mxu0 0.0
    %698 = vmatpush1.msra.mxu0 0.0
    %699 = vmatprep.subr.mxu0 0.0
    %700 = vmatpush1.msra.mxu0 0.0
    %701 = vmatprep.subr.mxu0 0.0
    %702 = vmatpush1.msra.mxu0 0.0
    %703 = vmatprep.subr.mxu0 0.0
    %704 = vmatpush1.msra.mxu0 0.0
    %705 = vmatprep.subr.mxu0 0.0
    %706 = vmatpush1.msra.mxu0 0.0
    %707 = vmatprep.mubr.f32.mxu0 0.0
    %708 = vmatmul.mubr.f32.gmra.mrb[0].mxu0 %v641
    %v709 = vpop.f32.mrb[0].mxu0
    %v710 = vadd.f32 %v637, %v709
    %v711 = vpop.f32.mrb[0].mxu0
    %712 = vdwg.mxu0
    %v713 = vmax.f32 %v710, 0.0
    %714 = vst [vmem:[#allocation5] sm:$0xff] %v713
    // Predicated region
    $region42: #{tpu_custom_call.1} parent=1 // pred_check
      _
    $region43: #{tpu_custom_call.1} parent=1 // pred_check_branch
      %716 = sbr.rel (0) target = $region45
    $region44: #{tpu_custom_call.1} parent=1 // pred_region
      %s718 = ssub.s32 128, 128
      %719 = vsyncadd [#allocation4], %s718
      %s721 = sshll.u32 [#allocation5], 4
      %s722 = int_to_ptr.vmem [resolvable:$true] %s721
      %724 = dma.vmem_to_hbm [thread:$0]  %s722, 128, %s9, [#allocation4]
    $region45: #{tpu_custom_call.1} parent=1 // pred_fallthru
      _
    // Predicated region
    $region46: #{tpu_custom_call.1} parent=1 // pred_check
      _
    $region47: #{tpu_custom_call.1} parent=1 // pred_check_branch
      %726 = sbr.rel (0) target = $region49
    $region48: #{tpu_custom_call.1} parent=1 // pred_region
      %727 = dma.done [#allocation4], 128
    $region49: #{tpu_custom_call.1} parent=1 // pred_fallthru
      _
    %728 = vsyncpa [#allocation3], 1
    %729 = vsyncpa [#allocation4], 1

</llo_original>
